<compile_context>
chip_gen: v7x
topology: tpu7x:2x2x1
jax: 0.10.0
libtpu: 0.0.40
codegen_flags: <defaults>
</compile_context>

<pallas_src>
import jax
import jax.numpy as jnp
from jax.experimental import pallas as pl
from jax.experimental.pallas import tpu as pltpu


def _vmem_sizes():
    """Per-generation (pipeline-block budget, scoped-vmem limit) in bytes."""
    phys = 64 * 1024 * 1024  # assume v7x-class (smallest) if the query fails
    try:
        info = pltpu.get_tpu_info()
        phys = int(getattr(info, "vmem_capacity_bytes", phys) or phys)
    except Exception:
        pass
    if phys >= 96 * 1024 * 1024:                   # v5e / v6e: 128 MiB physical
        return 48 * 1024 * 1024, 96 * 1024 * 1024
    return 20 * 1024 * 1024, 48 * 1024 * 1024      # v7x: 64 MiB physical


def _cdiv(a, b):
    return (a + b - 1) // b


def _round_up(x, m):
    return ((x + m - 1) // m) * m


def _soft_prompt_flat_kernel(prefix_ref, ctx_ref, suffix_ref, out_ref):
    """Lane-dense path: (token, dim) folded into the lane axis.

    prefix_ref: (C_BLK, dim)
    ctx_ref:    (1, nctx*dim)            -- constant block index -> VMEM resident
    suffix_ref: (C_BLK, suffix_len*dim)
    out_ref:    (C_BLK, seq_len*dim)
    """
    c_blk = out_ref.shape[0]
    dim = prefix_ref.shape[1]
    nctx_dim = ctx_ref.shape[1]
    # Three direct, lane-aligned slice stores (all offsets are multiples of 128
    # when dim % 128 == 0) -> unmasked vst, single copy pass, no concat temp.
    out_ref[:, :dim] = prefix_ref[...]
    # Sublane broadcast of the resident ctx row feeding straight into the store.
    # NOTE: a scratch tile filled once under pl.when(program_id(0)==0) would be
    # unsafe here: the class axis is "parallel", so a v7x core starting mid-grid
    # would never execute the init.
    out_ref[:, dim:dim + nctx_dim] = jnp.broadcast_to(ctx_ref[...], (c_blk, nctx_dim))
    out_ref[:, dim + nctx_dim:] = suffix_ref[...]


def _soft_prompt_3d_kernel(prefix_ref, ctx_ref, suffix_ref, out_ref):
    """KNOWN SLOW PATH (dim % 128 != 0 -> masked vst.msk band stores).

    Production CLIP dims (512/768) never take this branch; kept for generality.
    prefix_ref: (C_BLK, 1, dim)
    ctx_ref:    (nctx, dim)              -- constant block index -> VMEM resident
    suffix_ref: (C_BLK, suffix_len, dim)
    out_ref:    (C_BLK, seq_len, dim)
    """
    c_blk = out_ref.shape[0]
    nctx, dim = ctx_ref.shape
    suffix_len = suffix_ref.shape[1]
    out_ref[:, 0:1, :] = prefix_ref[...]
    out_ref[:, 1:1 + nctx, :] = jnp.broadcast_to(
        ctx_ref[...][None, :, :], (c_blk, nctx, dim))
    out_ref[:, 1 + nctx:1 + nctx + suffix_len, :] = suffix_ref[...]


def soft_prompt_forward(prefix_emb, ctx, suffix_emb, prompt_token_ids,
                        *, max_class_block=None, target_steps=8):
    """cat([prefix, ctx broadcast over classes, suffix], axis=1) on TPU."""
    num_classes, _, dim = prefix_emb.shape
    nctx = ctx.shape[0]
    suffix_len = suffix_emb.shape[1]
    seq_len = 1 + nctx + suffix_len

    # Unify dtypes explicitly (PyTorch keeps everything in clip_model.dtype).
    out_dtype = prefix_emb.dtype
    ctx = ctx.astype(out_dtype)
    suffix_emb = suffix_emb.astype(out_dtype)
    itemsize = jnp.dtype(out_dtype).itemsize
    sublane = {4: 8, 2: 16, 1: 32}.get(itemsize, 8)

    block_budget, vmem_limit = _vmem_sizes()

    # Per class row: prefix + suffix inputs + output block, double-buffered by
    # the Pallas pipeline; ctx is grid-resident (constant block index) -> fixed.
    per_class_bytes = 2 * (dim + suffix_len * dim + seq_len * dim) * itemsize
    fixed_bytes = 2 * nctx * dim * itemsize
    cap = max(1, (block_budget - fixed_bytes) // max(per_class_bytes, 1))
    if max_class_block is not None:
        cap = min(cap, int(max_class_block))
    cap = max(1, min(cap, num_classes))

    # Advisory: pure memory traffic, zero flops -> lets XLA overlap neighbors.
    bytes_read = (num_classes * (1 + suffix_len) * dim + nctx * dim) * itemsize
    bytes_written = num_classes * seq_len * dim * itemsize
    cost = pl.CostEstimate(flops=0, transcendentals=0,
                           bytes_accessed=bytes_read + bytes_written)

    compiler_params = pltpu.CompilerParams(
        dimension_semantics=("parallel",),   # v7x: shard class blocks over 2 TCs
        vmem_limit_bytes=vmem_limit,
    )

    use_flat = (dim % 128 == 0)

    if use_flat:
        # Aim for ~target_steps grid steps (and never fewer than 2 when there is
        # more than one sublane tile of classes) so both v7x cores get work and
        # fetch/compute/writeback overlap, while staying inside the VMEM budget.
        # cdiv grid handles a ragged final block -> no divisor search.
        want = max(1, _cdiv(num_classes, max(1, int(target_steps))))
        c_blk = min(cap, want)
        c_blk = max(sublane, (c_blk // sublane) * sublane)   # sublane axis of block
        c_blk = min(c_blk, _round_up(num_classes, sublane))
        if num_classes > sublane and _cdiv(num_classes, c_blk) < 2:
            c_blk = max(sublane, _round_up(_cdiv(num_classes, 2), sublane))
        grid = (_cdiv(num_classes, c_blk),)

        prefix_f = prefix_emb.reshape(num_classes, dim)
        suffix_f = suffix_emb.reshape(num_classes, suffix_len * dim)
        ctx_f = ctx.reshape(1, nctx * dim)
        out_flat = pl.pallas_call(
            _soft_prompt_flat_kernel,
            out_shape=jax.ShapeDtypeStruct((num_classes, seq_len * dim), out_dtype),
            grid_spec=pl.GridSpec(
                grid=grid,
                in_specs=[
                    pl.BlockSpec((c_blk, dim), lambda c: (c, 0)),               # prefix
                    pl.BlockSpec((1, nctx * dim), lambda c: (0, 0)),            # ctx (resident)
                    pl.BlockSpec((c_blk, suffix_len * dim), lambda c: (c, 0)),  # suffix
                ],
                out_specs=pl.BlockSpec((c_blk, seq_len * dim), lambda c: (c, 0)),
            ),
            compiler_params=compiler_params,
            cost_estimate=cost,
        )(prefix_f, ctx_f, suffix_f)
        soft_prompts = out_flat.reshape(num_classes, seq_len, dim)
    else:
        # Known slow fallback; keeps (N, L, D) blocks with full last-two dims.
        c_blk = max(1, min(cap, num_classes))
        grid = (_cdiv(num_classes, c_blk),)
        soft_prompts = pl.pallas_call(
            _soft_prompt_3d_kernel,
            out_shape=jax.ShapeDtypeStruct((num_classes, seq_len, dim), out_dtype),
            grid_spec=pl.GridSpec(
                grid=grid,
                in_specs=[
                    pl.BlockSpec((c_blk, 1, dim), lambda c: (c, 0, 0)),           # prefix
                    pl.BlockSpec((nctx, dim), lambda c: (0, 0)),                  # ctx (resident)
                    pl.BlockSpec((c_blk, suffix_len, dim), lambda c: (c, 0, 0)),  # suffix
                ],
                out_specs=pl.BlockSpec((c_blk, seq_len, dim), lambda c: (c, 0, 0)),
            ),
            compiler_params=compiler_params,
            cost_estimate=cost,
        )(prefix_emb, ctx, suffix_emb)

    # prompt_token_ids pass through unchanged (no compute in PyTorch either).
    return soft_prompts, prompt_token_ids


if __name__ == "__main__":
    key = jax.random.PRNGKey(0)

    def run_case(num_classes, nctx, dim, seq_len, max_class_block):
        suffix_len = seq_len - 1 - nctx
        k_ctx, k_emb, k_tok = jax.random.split(
            jax.random.fold_in(key, num_classes * 1000 + dim), 3)

        # nn.Parameter(torch.normal(mean=0, std=0.02, size=(nctx, dim)))
        ctx = (0.02 * jax.random.normal(k_ctx, (nctx, dim))).astype(jnp.float32)

        # Deterministic stand-in for clip_model.token_embedding(prompt_token_ids).
        # TODO(synk): real CLIP tokenizer / token_embedding lookup not reproduced.
        embeddings = jax.random.normal(
            k_emb, (num_classes, seq_len, dim)).astype(jnp.float32)
        prefix_emb = embeddings[:, :1, :]
        suffix_emb = embeddings[:, 1 + nctx:, :]
        prompt_token_ids = jax.random.randint(
            k_tok, (num_classes, seq_len), 0, 49408, dtype=jnp.int32)

        soft_prompts, token_ids = soft_prompt_forward(
            prefix_emb, ctx, suffix_emb, prompt_token_ids,
            max_class_block=max_class_block)
        soft_prompts = jax.block_until_ready(soft_prompts)
        token_ids = jax.block_until_ready(token_ids)

        ref = jnp.concatenate(
            [prefix_emb,
             jnp.broadcast_to(ctx[None, :, :], (num_classes, nctx, dim)),
             suffix_emb],
            axis=1)
        assert soft_prompts.shape == (num_classes, seq_len, dim)
        assert token_ids.shape == (num_classes, seq_len)
        assert jnp.allclose(soft_prompts, ref), "mismatch vs reference concat"

    # Lane-dense flat path (dim % 128 == 0): 3 grid steps of 8 classes each.
    run_case(num_classes=24, nctx=8, dim=128, seq_len=32, max_class_block=8)
    # Flat path with a ragged final block (cdiv grid, no divisor constraint).
    run_case(num_classes=20, nctx=4, dim=128, seq_len=16, max_class_block=None)
    # Fallback 3-D path (dim not a multiple of 128): 2 grid steps of 2 classes.
    run_case(num_classes=4, nctx=8, dim=32, seq_len=16, max_class_block=2)

    print("KERNEL_OK")
</pallas_src>

<mosaic_0001>
module attributes {stable_mosaic.version = 11 : i64} {
  func.func @_soft_prompt_flat_kernel(%arg0: i32, %arg1: memref<8x128xf32, #tpu.memory_space<vmem>>, %arg2: memref<1x1024xf32, #tpu.memory_space<vmem>>, %arg3: memref<8x2944xf32, #tpu.memory_space<vmem>>, %arg4: memref<8x4096xf32, #tpu.memory_space<vmem>>) attributes {dimension_semantics = [#tpu.dimension_semantics<parallel>], iteration_bounds = array<i64: 3>, scalar_prefetch = 0 : i64, scratch_operands = 0 : i64, tpu.core_type = #tpu.core_type<tc>, window_params = [{transform_indices = @transform_0, window_bounds = array<i64: 8, 128>}, {pipeline_mode = #tpu.pipeline_mode<synchronous>, transform_indices = @transform_1, window_bounds = array<i64: 1, 1024>}, {transform_indices = @transform_2, window_bounds = array<i64: 8, 2944>}, {transform_indices = @transform_3, window_bounds = array<i64: 8, 4096>}]} {
    %c0 = arith.constant 0 : index
    %c0_0 = arith.constant 0 : index
    %0 = vector.load %arg1[%c0, %c0_0] : memref<8x128xf32, #tpu.memory_space<vmem>>, vector<8x128xf32>
    %c0_1 = arith.constant 0 : index
    %c0_2 = arith.constant 0 : index
    %1 = vector.load %arg4[%c0_1, %c0_2] : memref<8x4096xf32, #tpu.memory_space<vmem>>, vector<8x128xf32>
    tpu.vector_store %arg4[%c0_1, %c0_2], %0 {strides = array<i32>} : memref<8x4096xf32, #tpu.memory_space<vmem>>, vector<8x128xf32>,
    %c0_3 = arith.constant 0 : index
    %c0_4 = arith.constant 0 : index
    %2 = vector.load %arg2[%c0_3, %c0_4] : memref<1x1024xf32, #tpu.memory_space<vmem>>, vector<1x1024xf32>
    %3 = vector.shape_cast %2 : vector<1x1024xf32> to vector<1x1024xf32>
    %4 = vector.broadcast %3 : vector<1x1024xf32> to vector<8x1024xf32>
    %c0_5 = arith.constant 0 : index
    %c128 = arith.constant 128 : index
    %5 = vector.load %arg4[%c0_5, %c128] : memref<8x4096xf32, #tpu.memory_space<vmem>>, vector<8x1024xf32>
    tpu.vector_store %arg4[%c0_5, %c128], %4 {strides = array<i32>} : memref<8x4096xf32, #tpu.memory_space<vmem>>, vector<8x1024xf32>,
    %c0_6 = arith.constant 0 : index
    %c0_7 = arith.constant 0 : index
    %6 = vector.load %arg3[%c0_6, %c0_7] : memref<8x2944xf32, #tpu.memory_space<vmem>>, vector<8x2944xf32>
    %c0_8 = arith.constant 0 : index
    %c1152 = arith.constant 1152 : index
    %7 = vector.load %arg4[%c0_8, %c1152] : memref<8x4096xf32, #tpu.memory_space<vmem>>, vector<8x2944xf32>
    tpu.vector_store %arg4[%c0_8, %c1152], %6 {strides = array<i32>} : memref<8x4096xf32, #tpu.memory_space<vmem>>, vector<8x2944xf32>,
    return
  }
  func.func @transform_0(%arg0: i32) -> (i32, i32) {
    %c0_i32 = arith.constant 0 : i32
    %c0_i32_0 = arith.constant 0 : i32
    return %arg0, %c0_i32 : i32, i32
  }
  func.func @transform_1(%arg0: i32) -> (i32, i32) {
    %c0_i32 = arith.constant 0 : i32
    %c0_i32_0 = arith.constant 0 : i32
    %c0_i32_1 = arith.constant 0 : i32
    return %c0_i32, %c0_i32_0 : i32, i32
  }
  func.func @transform_2(%arg0: i32) -> (i32, i32) {
    %c0_i32 = arith.constant 0 : i32
    %c0_i32_0 = arith.constant 0 : i32
    return %arg0, %c0_i32 : i32, i32
  }
  func.func @transform_3(%arg0: i32) -> (i32, i32) {
    %c0_i32 = arith.constant 0 : i32
    %c0_i32_0 = arith.constant 0 : i32
    return %arg0, %c0_i32 : i32, i32
  }
}

</mosaic_0001>

<llo_original>
// kernel: tpu_custom_call.1
$region0: #{tpu_custom_call.1}
  #allocation0 [shape = 'u32[]', space=smem, size = 0x4, offset = 0x4, fixed_abs, tag = 'smem constant byte address 0x4 - core index']
  #allocation1 [shape = 'u32[144,128]{1,0:T(1,128)}', space=vmem, size = 0x12000, scoped, tag = 'internal scratch']
  %s0 = inlined_call_operand.hbm [shape: f32[24,128], index: 0, kind: input, shape index: {}]
  %s1 = inlined_call_operand.hbm [shape: f32[1,1024], index: 1, kind: input, shape index: {}]
  %s2 = inlined_call_operand.hbm [shape: f32[24,2944], index: 2, kind: input, shape index: {}]
  %s3 = inlined_call_operand.hbm [shape: f32[24,4096], index: 3, kind: output, shape index: {}]
  %s4 = sld [smem:[#allocation0]]
  $region57: #{tpu_custom_call.1} parent=0
    _
  %s6 = ssub.s32 1, %s4
  %s7 = scalar_select 0, %s6, %s4
  $region1: #{tpu_custom_call.1} parent=0
    #allocation2 [shape = 'u8[8192]{0}', space=vmem, size = 0x2000, scoped, tag = 'input window, operand 0']
    #allocation3 [shape = 's32[2]{0}', space=sflag, size = 0x8, scoped, tag = 'scoped memory for tpu_custom_call.1']
    #allocation4 [shape = 's32[2]{0}', space=sflag, size = 0x8, scoped, tag = 'scoped memory for tpu_custom_call.1']
    #allocation5 [shape = 'u8[4096]{0}', space=vmem, size = 0x1000, scoped, tag = 'input window, operand 1, single buffered']
    #allocation6 [shape = 's32[1]{0}', space=sflag, size = 0x4, scoped, tag = 'scoped memory for tpu_custom_call.1']
    #allocation7 [shape = 'u8[188416]{0}', space=vmem, size = 0x2e000, scoped, tag = 'input window, operand 2']
    #allocation8 [shape = 'u8[262144]{0}', space=vmem, size = 0x40000, scoped, tag = 'output window, operand 0']
    %8 = vsyncpa [#allocation3], 0
    %s9 = scalar_lea.sflag [#allocation3], 1
    %10 = vsyncpa %s9, 0
    %11 = vsyncpa [#allocation6], 0
    %12 = vsyncpa [#allocation4], 0
    %s13 = scalar_lea.sflag [#allocation4], 1
    %14 = vsyncpa %s13, 0
    loop: start=0, step=1, limit=5
    $region2: #{tpu_custom_call.1} parent=1 // loop_pre_header
      _
    $region3: #{tpu_custom_call.1} parent=1 // loop_header
      %s16 = sphi 0, %s20
      %p17 = scmp.ge.s32.totalorder %s16, 5
      %s26 = sphi 0, %s28
      %s29 = sphi 0, %s26
      %s30 = sphi 0, %s29
      %s46 = sphi 0, %s30
      %s50 = sphi 0, %s50
      %s52 = sphi 0, %s50
      %s53 = sphi 0, %s52
      %s67 = sphi 0, %s53
      %s73 = sphi 0, %s75
      %s76 = sphi 0, %s73
      %s77 = sphi 0, %s76
      %s93 = sphi 0, %s77
      %s99 = sphi 0, %s101
      %s102 = sphi 0, %s99
      %s103 = sphi 0, %s102
      %s119 = sphi 0, %s103
    $region4: #{tpu_custom_call.1} parent=1 // loop_header_branch
      %19 = sbr.rel (%p17) target = $region8
    $region5: #{tpu_custom_call.1} parent=1 // loop_body
      %s21 = ssub.s32 %s16, 1
      %s22 = ssub.s32 %s16, 2
      %s23 = sadd.s32 %s16, 1
      %s24 = ssub.s32 %s16, %s23
      %p25 = scmp.eq.s32.totalorder %s24, 0
      %s27 = sadd.s32 %s26, 1
      %s28 = scalar_select %p25, %s26, %s27
      %p31 = pneg %p25
      %p32 = scmp.eq.s32.totalorder %s16, 2
      %p33 = por %p31, %p32
      %p34 = scmp.ne.s32.totalorder %s26, %s29
      %p35 = scmp.eq.s32.totalorder %s16, 0
      %p36 = por %p34, %p35
      %p37 = scmp.ne.s32.totalorder %s26, %s29
      %p38 = scmp.eq.s32.totalorder %s21, 2
      %p39 = por %p37, %p38
      %p40 = scmp.ne.s32.totalorder %s29, %s30
      %p41 = scmp.eq.s32.totalorder %s21, 0
      %p42 = por %p40, %p41
      %p43 = scmp.ne.s32.totalorder %s29, %s30
      %p44 = scmp.eq.s32.totalorder %s22, 2
      %p45 = por %p43, %p44
      %p47 = scmp.ne.s32.totalorder %s30, %s46
      %p48 = scmp.eq.s32.totalorder %s22, 0
      %p49 = por %p47, %p48
      %s51 = sadd.s32 %s50, 1
      %p54 = scmp.eq.s32.totalorder %s16, 2
      %p55 = scmp.ne.s32.totalorder %s50, %s52
      %p56 = scmp.eq.s32.totalorder %s16, 0
      %p57 = por %p55, %p56
      %p58 = scmp.ne.s32.totalorder %s50, %s52
      %p59 = scmp.eq.s32.totalorder %s21, 2
      %p60 = por %p58, %p59
      %p61 = scmp.ne.s32.totalorder %s52, %s53
      %p62 = scmp.eq.s32.totalorder %s21, 0
      %p63 = por %p61, %p62
      %p64 = scmp.ne.s32.totalorder %s52, %s53
      %p65 = scmp.eq.s32.totalorder %s22, 2
      %p66 = por %p64, %p65
      %p68 = scmp.ne.s32.totalorder %s53, %s67
      %p69 = scmp.eq.s32.totalorder %s22, 0
      %p70 = por %p68, %p69
      %s71 = ssub.s32 %s16, %s23
      %p72 = scmp.eq.s32.totalorder %s71, 0
      %s74 = sadd.s32 %s73, 1
      %s75 = scalar_select %p72, %s73, %s74
      %p78 = pneg %p72
      %p79 = scmp.eq.s32.totalorder %s16, 2
      %p80 = por %p78, %p79
      %p81 = scmp.ne.s32.totalorder %s73, %s76
      %p82 = scmp.eq.s32.totalorder %s16, 0
      %p83 = por %p81, %p82
      %p84 = scmp.ne.s32.totalorder %s73, %s76
      %p85 = scmp.eq.s32.totalorder %s21, 2
      %p86 = por %p84, %p85
      %p87 = scmp.ne.s32.totalorder %s76, %s77
      %p88 = scmp.eq.s32.totalorder %s21, 0
      %p89 = por %p87, %p88
      %p90 = scmp.ne.s32.totalorder %s76, %s77
      %p91 = scmp.eq.s32.totalorder %s22, 2
      %p92 = por %p90, %p91
      %p94 = scmp.ne.s32.totalorder %s77, %s93
      %p95 = scmp.eq.s32.totalorder %s22, 0
      %p96 = por %p94, %p95
      %s97 = ssub.s32 %s16, %s23
      %p98 = scmp.eq.s32.totalorder %s97, 0
      %s100 = sadd.s32 %s99, 1
      %s101 = scalar_select %p98, %s99, %s100
      %p104 = pneg %p98
      %p105 = scmp.eq.s32.totalorder %s16, 2
      %p106 = por %p104, %p105
      %p107 = scmp.ne.s32.totalorder %s99, %s102
      %p108 = scmp.eq.s32.totalorder %s16, 0
      %p109 = por %p107, %p108
      %p110 = scmp.ne.s32.totalorder %s99, %s102
      %p111 = scmp.eq.s32.totalorder %s21, 2
      %p112 = por %p110, %p111
      %p113 = scmp.ne.s32.totalorder %s102, %s103
      %p114 = scmp.eq.s32.totalorder %s21, 0
      %p115 = por %p113, %p114
      %p116 = scmp.ne.s32.totalorder %s102, %s103
      %p117 = scmp.eq.s32.totalorder %s22, 2
      %p118 = por %p116, %p117
      %p120 = scmp.ne.s32.totalorder %s103, %s119
      %p121 = scmp.eq.s32.totalorder %s22, 0
      %p122 = por %p120, %p121
      %p123 = scmp.le.s32.totalorder 1, %s16
      %p124 = scmp.lt.s32.totalorder %s16, 4
      %p125 = pnand %p123, %p124
      %p126 = pneg %p125
      // Predicated region
      $region9: #{tpu_custom_call.1} parent=5 // pred_check
        _
      $region10: #{tpu_custom_call.1} parent=5 // pred_check_branch
        %128 = sbr.rel (%p125) target = $region12
      $region11: #{tpu_custom_call.1} parent=5 // pred_region
        %s129 = ssub.s32 %s16, 1
        // Predicated region
        $region13: #{tpu_custom_call.1} parent=11 // pred_check
          %p130 = pneg %p63
        $region14: #{tpu_custom_call.1} parent=11 // pred_check_branch
          %132 = sbr.rel (%p130) target = $region16
        $region15: #{tpu_custom_call.1} parent=11 // pred_region
          %s134 = ssub.s32 128, 128
          %135 = vsyncadd [#allocation6], %s134
          %s137 = sshll.u32 [#allocation5], 4
          %s138 = int_to_ptr.vmem [resolvable:$true] %s137
          %140 = dma.hbm_to_vmem [thread:$0]  %s1, 128, %s138, [#allocation6]
        $region16: #{tpu_custom_call.1} parent=11 // pred_fallthru
          _
      $region12: #{tpu_custom_call.1} parent=5 // pred_fallthru
        _
      %p141 = scmp.lt.s32.totalorder %s16, 3
      // Predicated region
      $region17: #{tpu_custom_call.1} parent=5 // pred_check
        %p142 = pneg %p141
      $region18: #{tpu_custom_call.1} parent=5 // pred_check_branch
        %144 = sbr.rel (%p142) target = $region20
      $region19: #{tpu_custom_call.1} parent=5 // pred_region
        // Predicated region
        $region21: #{tpu_custom_call.1} parent=19 // pred_check
          %p145 = pneg %p36
        $region22: #{tpu_custom_call.1} parent=19 // pred_check_branch
          %147 = sbr.rel (%p145) target = $region24
        $region23: #{tpu_custom_call.1} parent=19 // pred_region
          %s148 = sand.u32 %s16, 1
          %s149 = scalar_lea.sflag [#allocation3], %s148
          %s150 = sand.u32 %s26, 1
          %s151 = smul.addr %s150, 8
          %s152 = scalar_lea.vmem [#allocation2], %s151
          %s154 = ssub.s32 128, 128
          %155 = vsyncadd %s149, %s154
          %s156 = smul.addr %s16, 128
          %s157 = scalar_lea.hbm %s0, %s156
          %s159 = sshll.u32 %s152, 4
          %s160 = int_to_ptr.vmem [resolvable:$true] %s159
          %162 = dma.hbm_to_vmem [thread:$0]  %s157, 128, %s160, %s149
        $region24: #{tpu_custom_call.1} parent=19 // pred_fallthru
          _
        // Predicated region
        $region25: #{tpu_custom_call.1} parent=19 // pred_check
          %p163 = pneg %p83
        $region26: #{tpu_custom_call.1} parent=19 // pred_check_branch
          %165 = sbr.rel (%p163) target = $region28
        $region27: #{tpu_custom_call.1} parent=19 // pred_region
          %s166 = sand.u32 %s16, 1
          %s167 = scalar_lea.sflag [#allocation3], %s166
          %s168 = sand.u32 %s73, 1
          %s169 = smul.addr %s168, 184
          %s170 = scalar_lea.vmem [#allocation7], %s169
          %s172 = ssub.s32 2944, 2944
          %173 = vsyncadd %s167, %s172
          %s174 = smul.addr %s16, 23
          %s175 = smul.addr %s174, 128
          %s176 = scalar_lea.hbm %s2, %s175
          %s178 = sshll.u32 %s170, 4
          %s179 = int_to_ptr.vmem [resolvable:$true] %s178
          %181 = dma.hbm_to_vmem [thread:$0]  %s176, 2944, %s179, %s167
        $region28: #{tpu_custom_call.1} parent=19 // pred_fallthru
          _
      $region20: #{tpu_custom_call.1} parent=5 // pred_fallthru
        _
      %p182 = scmp.le.s32.totalorder 1, %s16
      %p183 = scmp.lt.s32.totalorder %s16, 4
      %p184 = pnand %p182, %p183
      %p185 = pneg %p184
      // Predicated region
      $region29: #{tpu_custom_call.1} parent=5 // pred_check
        _
      $region30: #{tpu_custom_call.1} parent=5 // pred_check_branch
        %187 = sbr.rel (%p184) target = $region32
      $region31: #{tpu_custom_call.1} parent=5 // pred_region
        %s188 = ssub.s32 %s16, 1
        %s189 = sand.u32 %s21, 1
        %s190 = scalar_lea.sflag [#allocation3], %s189
        %s191 = sand.u32 %s29, 1
        %s192 = smul.addr %s191, 8
        %s193 = scalar_lea.vmem [#allocation2], %s192
        // Predicated region
        $region33: #{tpu_custom_call.1} parent=31 // pred_check
          %p194 = pneg %p42
        $region34: #{tpu_custom_call.1} parent=31 // pred_check_branch
          %196 = sbr.rel (%p194) target = $region36
        $region35: #{tpu_custom_call.1} parent=31 // pred_region
          %197 = dma.done %s190, 128
        $region36: #{tpu_custom_call.1} parent=31 // pred_fallthru
          _
        // Predicated region
        $region37: #{tpu_custom_call.1} parent=31 // pred_check
          %p198 = pneg %p63
        $region38: #{tpu_custom_call.1} parent=31 // pred_check_branch
          %200 = sbr.rel (%p198) target = $region40
        $region39: #{tpu_custom_call.1} parent=31 // pred_region
          %201 = dma.done [#allocation6], 128
        $region40: #{tpu_custom_call.1} parent=31 // pred_fallthru
          _
        %s202 = sand.u32 %s21, 1
        %s203 = scalar_lea.sflag [#allocation3], %s202
        %s204 = sand.u32 %s76, 1
        %s205 = smul.addr %s204, 184
        %s206 = scalar_lea.vmem [#allocation7], %s205
        // Predicated region
        $region41: #{tpu_custom_call.1} parent=31 // pred_check
          %p207 = pneg %p89
        $region42: #{tpu_custom_call.1} parent=31 // pred_check_branch
          %209 = sbr.rel (%p207) target = $region44
        $region43: #{tpu_custom_call.1} parent=31 // pred_region
          %210 = dma.done %s203, 2944
        $region44: #{tpu_custom_call.1} parent=31 // pred_fallthru
          _
        %s211 = sand.u32 %s21, 1
        %s212 = scalar_lea.sflag [#allocation3], %s211
        %s213 = sand.u32 %s29, 1
        %s214 = smul.addr %s213, 8
        %s215 = scalar_lea.vmem [#allocation2], %s214
        %p216 = pneg %p42
        %p217 = pneg %p39
        %p218 = pneg %p63
        %p219 = pneg %p60
        %s220 = sand.u32 %s21, 1
        %s221 = scalar_lea.sflag [#allocation3], %s220
        %s222 = sand.u32 %s76, 1
        %s223 = smul.addr %s222, 184
        %s224 = scalar_lea.vmem [#allocation7], %s223
        %p225 = pneg %p89
        %p226 = pneg %p86
        %p227 = pneg %p115
        %p228 = pneg %p112
        %s229 = sand.u32 %s102, 1
        %s230 = scalar_lea.sflag [#allocation4], %s229
        %s231 = sand.u32 %s102, 1
        %s232 = smul.addr %s231, 256
        %s233 = scalar_lea.vmem [#allocation8], %s232
        %v234 = vld [vmem:[%s193] sm:$0xff]
        %235 = vst [vmem:[%s233] sm:$0xff] %v234
        %v236 = vld [vmem:[#allocation5] sm:$0xff]
        %v238 = vlaneseq
        %v239 = vshrl.u32 %v238, 7
        %v240 = vsub.s32 0, %v239
        %v241 = vrot.slane %v236, %v240
        %v242 = vlaneseq
        %v243 = vshrl.u32 %v242, 7
        %v244 = vsub.s32 1, %v243
        %v245 = vrot.slane %v236, %v244
        %v246 = vlaneseq
        %v247 = vshrl.u32 %v246, 7
        %v248 = vsub.s32 2, %v247
        %v249 = vrot.slane %v236, %v248
        %v250 = vlaneseq
        %v251 = vshrl.u32 %v250, 7
        %v252 = vsub.s32 3, %v251
        %v253 = vrot.slane %v236, %v252
        %v254 = vlaneseq
        %v255 = vshrl.u32 %v254, 7
        %v256 = vsub.s32 4, %v255
        %v257 = vrot.slane %v236, %v256
        %v258 = vlaneseq
        %v259 = vshrl.u32 %v258, 7
        %v260 = vsub.s32 5, %v259
        %v261 = vrot.slane %v236, %v260
        %v262 = vlaneseq
        %v263 = vshrl.u32 %v262, 7
        %v264 = vsub.s32 6, %v263
        %v265 = vrot.slane %v236, %v264
        %v266 = vlaneseq
        %v267 = vshrl.u32 %v266, 7
        %v268 = vsub.s32 7, %v267
        %v269 = vrot.slane %v236, %v268
        %278 = vst [vmem:[%s233 + $0x8] sm:$0xff] %v241
        %279 = vst [vmem:[%s233 + $0x10] sm:$0xff] %v245
        %280 = vst [vmem:[%s233 + $0x18] sm:$0xff] %v249
        %281 = vst [vmem:[%s233 + $0x20] sm:$0xff] %v253
        %282 = vst [vmem:[%s233 + $0x28] sm:$0xff] %v257
        %283 = vst [vmem:[%s233 + $0x30] sm:$0xff] %v261
        %284 = vst [vmem:[%s233 + $0x38] sm:$0xff] %v265
        %285 = vst [vmem:[%s233 + $0x40] sm:$0xff] %v269
        %v286 = vld [vmem:[%s206] sm:$0xff]
        %v287 = vld [vmem:[%s206 + $0x8] sm:$0xff]
        %v288 = vld [vmem:[%s206 + $0x10] sm:$0xff]
        %v289 = vld [vmem:[%s206 + $0x18] sm:$0xff]
        %v290 = vld [vmem:[%s206 + $0x20] sm:$0xff]
        %v291 = vld [vmem:[%s206 + $0x28] sm:$0xff]
        %v292 = vld [vmem:[%s206 + $0x30] sm:$0xff]
        %v293 = vld [vmem:[%s206 + $0x38] sm:$0xff]
        %v294 = vld [vmem:[%s206 + $0x40] sm:$0xff]
        %v295 = vld [vmem:[%s206 + $0x48] sm:$0xff]
        %v296 = vld [vmem:[%s206 + $0x50] sm:$0xff]
        %v297 = vld [vmem:[%s206 + $0x58] sm:$0xff]
        %v298 = vld [vmem:[%s206 + $0x60] sm:$0xff]
        %v299 = vld [vmem:[%s206 + $0x68] sm:$0xff]
        %v300 = vld [vmem:[%s206 + $0x70] sm:$0xff]
        %v301 = vld [vmem:[%s206 + $0x78] sm:$0xff]
        %v302 = vld [vmem:[%s206 + $0x80] sm:$0xff]
        %v303 = vld [vmem:[%s206 + $0x88] sm:$0xff]
        %v304 = vld [vmem:[%s206 + $0x90] sm:$0xff]
        %v305 = vld [vmem:[%s206 + $0x98] sm:$0xff]
        %v306 = vld [vmem:[%s206 + $0xa0] sm:$0xff]
        %v307 = vld [vmem:[%s206 + $0xa8] sm:$0xff]
        %v308 = vld [vmem:[%s206 + $0xb0] sm:$0xff]
        %309 = vst [vmem:[%s233 + $0x48] sm:$0xff] %v286
        %310 = vst [vmem:[%s233 + $0x50] sm:$0xff] %v287
        %311 = vst [vmem:[%s233 + $0x58] sm:$0xff] %v288
        %312 = vst [vmem:[%s233 + $0x60] sm:$0xff] %v289
        %313 = vst [vmem:[%s233 + $0x68] sm:$0xff] %v290
        %314 = vst [vmem:[%s233 + $0x70] sm:$0xff] %v291
        %315 = vst [vmem:[%s233 + $0x78] sm:$0xff] %v292
        %316 = vst [vmem:[%s233 + $0x80] sm:$0xff] %v293
        %317 = vst [vmem:[%s233 + $0x88] sm:$0xff] %v294
        %318 = vst [vmem:[%s233 + $0x90] sm:$0xff] %v295
        %319 = vst [vmem:[%s233 + $0x98] sm:$0xff] %v296
        %320 = vst [vmem:[%s233 + $0xa0] sm:$0xff] %v297
        %321 = vst [vmem:[%s233 + $0xa8] sm:$0xff] %v298
        %322 = vst [vmem:[%s233 + $0xb0] sm:$0xff] %v299
        %323 = vst [vmem:[%s233 + $0xb8] sm:$0xff] %v300
        %324 = vst [vmem:[%s233 + $0xc0] sm:$0xff] %v301
        %325 = vst [vmem:[%s233 + $0xc8] sm:$0xff] %v302
        %326 = vst [vmem:[%s233 + $0xd0] sm:$0xff] %v303
        %327 = vst [vmem:[%s233 + $0xd8] sm:$0xff] %v304
        %328 = vst [vmem:[%s233 + $0xe0] sm:$0xff] %v305
        %329 = vst [vmem:[%s233 + $0xe8] sm:$0xff] %v306
        %330 = vst [vmem:[%s233 + $0xf0] sm:$0xff] %v307
        %331 = vst [vmem:[%s233 + $0xf8] sm:$0xff] %v308
        %s332 = sand.u32 %s102, 1
        %s333 = scalar_lea.sflag [#allocation4], %s332
        %s334 = sand.u32 %s102, 1
        %s335 = smul.addr %s334, 256
        %s336 = scalar_lea.vmem [#allocation8], %s335
        // Predicated region
        $region45: #{tpu_custom_call.1} parent=31 // pred_check
          %p337 = pneg %p112
        $region46: #{tpu_custom_call.1} parent=31 // pred_check_branch
          %339 = sbr.rel (%p337) target = $region48
        $region47: #{tpu_custom_call.1} parent=31 // pred_region
          %s341 = ssub.s32 4096, 4096
          %342 = vsyncadd %s333, %s341
          %s343 = smul.addr %s21, 32
          %s344 = smul.addr %s343, 128
          %s345 = scalar_lea.hbm %s3, %s344
          %s347 = sshll.u32 %s336, 4
          %s348 = int_to_ptr.vmem [resolvable:$true] %s347
          %350 = dma.vmem_to_hbm [thread:$0]  %s348, 4096, %s345, %s333
        $region48: #{tpu_custom_call.1} parent=31 // pred_fallthru
          _
      $region32: #{tpu_custom_call.1} parent=5 // pred_fallthru
        _
      %p351 = scmp.le.s32.totalorder 2, %s16
      // Predicated region
      $region49: #{tpu_custom_call.1} parent=5 // pred_check
        %p352 = pneg %p351
      $region50: #{tpu_custom_call.1} parent=5 // pred_check_branch
        %354 = sbr.rel (%p352) target = $region52
      $region51: #{tpu_custom_call.1} parent=5 // pred_region
        %s355 = ssub.s32 %s16, 2
        // Predicated region
        $region53: #{tpu_custom_call.1} parent=51 // pred_check
          %p356 = pneg %p118
        $region54: #{tpu_custom_call.1} parent=51 // pred_check_branch
          %358 = sbr.rel (%p356) target = $region56
        $region55: #{tpu_custom_call.1} parent=51 // pred_region
          %s359 = sand.u32 %s103, 1
          %s360 = scalar_lea.sflag [#allocation4], %s359
          %s361 = sand.u32 %s103, 1
          %s362 = smul.addr %s361, 256
          %s363 = scalar_lea.vmem [#allocation8], %s362
          %364 = dma.done %s360, 4096
        $region56: #{tpu_custom_call.1} parent=51 // pred_fallthru
          _
      $region52: #{tpu_custom_call.1} parent=5 // pred_fallthru
        _
    $region6: #{tpu_custom_call.1} parent=1 // loop_footer
      %s20 = sadd.s32 1, %s16
    $region7: #{tpu_custom_call.1} parent=1 // loop_footer_branch
      %15 = sbr.rel target = $region3
    $region8: #{tpu_custom_call.1} parent=1 // loop_exit
      _
    %365 = vsyncpa [#allocation3], 1
    %s366 = scalar_lea.sflag [#allocation3], 1
    %367 = vsyncpa %s366, 1
    %368 = vsyncpa [#allocation6], 1
    %369 = vsyncpa [#allocation4], 1
    %s370 = scalar_lea.sflag [#allocation4], 1
    %371 = vsyncpa %s370, 1

</llo_original>
